<compile_context>
chip_gen: v5e
topology: v5e:2x2
jax: 0.10.0
libtpu: 0.0.40
codegen_flags: <defaults>
</compile_context>

<pallas_src>
import functools

import jax
import jax.numpy as jnp
from jax import lax
from jax.experimental import pallas as pl
from jax.experimental.pallas import tpu as pltpu

_LANE = 128
_SUBLANE = 8
_CHUNK = _SUBLANE * _LANE  # 1024 elements = one (8,128) f32 vreg


def _cdiv(a, b):
    return -(-a // b)


def _y_moments_kernel(y_ref, ysum_ref, ysq_ref, *, n_y, tb, spc):
    """Accumulate per-(sublane, lane) partial sums of y and y*y.

    Grid = (core_splits, steps_per_core). Each core split owns one (8,128) f32
    output block for sum(y) and one for sum(y*y); the blocks are resident
    accumulators across the trailing "arbitrary" axis.
    """
    core = pl.program_id(0)
    step = pl.program_id(1)

    @pl.when(step == 0)
    def _init():
        ysum_ref[...] = jnp.zeros_like(ysum_ref)
        ysq_ref[...] = jnp.zeros_like(ysq_ref)

    nslab = tb // _SUBLANE
    # Logical flat offset of this tile's first element (int32; fine for n_y < 2^31).
    tile_start = (core * spc + step) * (tb * _LANE)

    def _accumulate(get_slab):
        # Fused single pass: per (8,128) slab -> 1 vld + add + mul + add.
        def body(i, carry):
            s, q = carry
            slab = get_slab(i)
            return s + slab, q + slab * slab

        s, q = lax.fori_loop(0, nslab, body,
                             (ysum_ref[...], ysq_ref[...]),
                             unroll=min(8, nslab))
        ysum_ref[...] = s
        ysq_ref[...] = q

    fully_valid = tile_start + tb * _LANE <= n_y

    @pl.when(fully_valid)
    def _fast():
        def get(i):
            r0 = pl.multiple_of(i * _SUBLANE, _SUBLANE)
            return y_ref[pl.ds(r0, _SUBLANE), :].astype(jnp.float32)

        _accumulate(get)

    @pl.when(jnp.logical_not(fully_valid))
    def _tail():
        # Ragged / over-covered tile: mask by global element index against n_y.
        pos = (lax.broadcasted_iota(jnp.int32, (_SUBLANE, _LANE), 0) * _LANE
               + lax.broadcasted_iota(jnp.int32, (_SUBLANE, _LANE), 1))

        def get(i):
            r0 = pl.multiple_of(i * _SUBLANE, _SUBLANE)
            slab = y_ref[pl.ds(r0, _SUBLANE), :].astype(jnp.float32)
            gidx = tile_start + i * _CHUNK + pos
            return jnp.where(gidx < n_y, slab, 0.0)

        _accumulate(get)


def coefficient_pce_loss(y_pred, c, lam_mean=1.0, lam_var=1.0,
                         block_rows=8192, num_core_splits=2):
    """y_pred: any-shape array, c: (N, K). Returns scalar float32 loss."""
    n_y = int(y_pred.size)

    # ---- lane-dense view of y_pred (free reshape for 1024-aligned sizes) ----
    y_flat = jnp.ravel(y_pred)
    rem = n_y % _CHUNK
    if rem:
        # Minimal pad to the next (8,128) chunk; zeros are masked in-kernel anyway.
        y_flat = jnp.pad(y_flat, (0, _CHUNK - rem))
    rows = int(y_flat.size) // _LANE          # multiple of 8
    y2 = y_flat.reshape(rows, _LANE)          # bitcast reshape, no copy

    # ---- tiling / core split ----
    tb = int(min(block_rows, rows))
    tb = max(_SUBLANE, (tb // _SUBLANE) * _SUBLANE)
    splits = int(num_core_splits) if rows // tb >= int(num_core_splits) else 1
    spc = _cdiv(_cdiv(rows, splits), tb)      # steps per core split

    # ---- VMEM budget derived from the chip, not a magic clamp ----
    try:
        vmem_cap = int(getattr(pltpu.get_tpu_info(), "vmem_capacity_bytes",
                               64 << 20))
    except Exception:
        vmem_cap = 64 << 20
    vmem_needed = (2 * tb * _LANE * y2.dtype.itemsize       # double-buffered y tile
                   + 4 * splits * _SUBLANE * _LANE * 4      # tiny partial-sum outputs
                   + (2 << 20))                              # Mosaic headroom
    vmem_limit = int(min(max(vmem_needed, 4 << 20), max(vmem_cap // 2, 8 << 20)))

    cost = pl.CostEstimate(
        flops=3 * n_y,
        transcendentals=0,
        bytes_accessed=int(y2.size) * y2.dtype.itemsize
        + 2 * splits * _SUBLANE * _LANE * 4,
    )

    kernel = functools.partial(_y_moments_kernel, n_y=n_y, tb=tb, spc=spc)
    part_shape = jax.ShapeDtypeStruct((splits * _SUBLANE, _LANE), jnp.float32)

    ysum, ysq = pl.pallas_call(
        kernel,
        out_shape=(part_shape, part_shape),
        grid=(splits, spc),
        in_specs=[
            pl.BlockSpec((tb, _LANE), lambda cidx, s: (cidx * spc + s, 0)),
        ],
        out_specs=(
            pl.BlockSpec((_SUBLANE, _LANE), lambda cidx, s: (cidx, 0)),
            pl.BlockSpec((_SUBLANE, _LANE), lambda cidx, s: (cidx, 0)),
        ),
        compiler_params=pltpu.CompilerParams(
            dimension_semantics=("parallel", "arbitrary"),
            vmem_limit_bytes=vmem_limit,
        ),
        cost_estimate=cost,
    )(y2)

    # ---- tiny epilogue in plain JAX (c stats + scalar combine) ----
    n_yf = jnp.float32(n_y)
    y_sum = jnp.sum(ysum)
    y_sqsum = jnp.sum(ysq)
    y_mean = y_sum / n_yf
    # torch.Tensor.var() default: unbiased (n-1).
    y_var = (y_sqsum - n_yf * y_mean * y_mean) / (n_yf - 1.0)

    c32 = c.astype(jnp.float32)
    c_mean = jnp.mean(c32, axis=0)
    loss = (jnp.float32(lam_mean) * jnp.abs(c_mean[0] - y_mean)
            + jnp.float32(lam_var) * jnp.abs(jnp.sum(c_mean[1:] ** 2) - y_var))
    return loss


def _reference(y_pred, c, lam_mean=1.0, lam_var=1.0):
    c_mean = jnp.mean(c, axis=0)
    c_inter = c_mean[1:]
    n = y_pred.size
    y_mean = jnp.mean(y_pred)
    y_var = jnp.sum((y_pred - y_mean) ** 2) / (n - 1)   # unbiased, as torch.var()
    return (lam_mean * jnp.abs(c_mean[0] - y_mean)
            + lam_var * jnp.abs(jnp.sum(c_inter ** 2) - y_var))


if __name__ == "__main__":
    key = jax.random.PRNGKey(0)
    k1, k2, k3, k4, k5 = jax.random.split(key, 5)

    # Check 1: aligned shapes (no pad, single tile, single core split).
    y_pred = jax.random.normal(k1, (8, 128), dtype=jnp.float32)
    c = jax.random.normal(k2, (16, 128), dtype=jnp.float32)
    loss = coefficient_pce_loss(y_pred, c, lam_mean=1.0, lam_var=1.0)
    jax.block_until_ready(loss)
    ref = _reference(y_pred, c, 1.0, 1.0)
    assert jnp.allclose(loss, ref, rtol=1e-5, atol=1e-5), (loss, ref)

    # Check 2: ragged size exercising the in-kernel mask / minimal pad path.
    y_pred2 = 0.5 + 2.0 * jax.random.normal(k3, (5, 100), dtype=jnp.float32)
    c2 = jax.random.normal(k4, (16, 128), dtype=jnp.float32)
    loss2 = coefficient_pce_loss(y_pred2, c2, lam_mean=0.7, lam_var=1.3)
    jax.block_until_ready(loss2)
    ref2 = _reference(y_pred2, c2, 0.7, 1.3)
    assert jnp.allclose(loss2, ref2, rtol=1e-5, atol=1e-5), (loss2, ref2)

    # Check 3: multi-step grid + 2-way core split + clamped/masked tail block.
    y_pred3 = jax.random.normal(k5, (40, 256), dtype=jnp.float32)   # 10240 elems
    loss3 = coefficient_pce_loss(y_pred3, c, lam_mean=1.1, lam_var=0.9,
                                 block_rows=16, num_core_splits=2)
    jax.block_until_ready(loss3)
    ref3 = _reference(y_pred3, c, 1.1, 0.9)
    assert jnp.allclose(loss3, ref3, rtol=1e-5, atol=1e-5), (loss3, ref3)

    print("KERNEL_OK")
</pallas_src>

<mosaic_0001>
module attributes {stable_mosaic.version = 11 : i64} {
  func.func @_y_moments_kernel(%arg0: i32, %arg1: i32, %arg2: memref<8x128xf32, #tpu.memory_space<vmem>>, %arg3: memref<8x128xf32, #tpu.memory_space<vmem>>, %arg4: memref<8x128xf32, #tpu.memory_space<vmem>>) attributes {dimension_semantics = [#tpu.dimension_semantics<parallel>, #tpu.dimension_semantics<arbitrary>], iteration_bounds = array<i64: 1, 1>, scalar_prefetch = 0 : i64, scratch_operands = 0 : i64, tpu.core_type = #tpu.core_type<tc>, window_params = [{transform_indices = @transform_0, window_bounds = array<i64: 8, 128>}, {transform_indices = @transform_1, window_bounds = array<i64: 8, 128>}, {transform_indices = @transform_2, window_bounds = array<i64: 8, 128>}]} {
    %c0_i32 = arith.constant 0 : i32
    %0 = arith.cmpi eq, %arg1, %c0_i32 : i32
    %1 = arith.extui %0 : i1 to i32
    %c0_i32_0 = arith.constant 0 : i32
    %2 = arith.cmpi ne, %1, %c0_i32_0 : i32
    scf.if %2 {
      %cst = arith.constant 0.000000e+00 : f32
      %13 = vector.broadcast %cst : f32 to vector<8x128xf32>
      %c0 = arith.constant 0 : index
      %c0_5 = arith.constant 0 : index
      %14 = vector.load %arg3[%c0, %c0_5] : memref<8x128xf32, #tpu.memory_space<vmem>>, vector<8x128xf32>
      tpu.vector_store %arg3[%c0, %c0_5], %13 {strides = array<i32>} : memref<8x128xf32, #tpu.memory_space<vmem>>, vector<8x128xf32>,
      %cst_6 = arith.constant 0.000000e+00 : f32
      %15 = vector.broadcast %cst_6 : f32 to vector<8x128xf32>
      %c0_7 = arith.constant 0 : index
      %c0_8 = arith.constant 0 : index
      %16 = vector.load %arg4[%c0_7, %c0_8] : memref<8x128xf32, #tpu.memory_space<vmem>>, vector<8x128xf32>
      tpu.vector_store %arg4[%c0_7, %c0_8], %15 {strides = array<i32>} : memref<8x128xf32, #tpu.memory_space<vmem>>, vector<8x128xf32>,
    } else {
    }
    %c1_i32 = arith.constant 1 : i32
    %3 = arith.muli %arg0, %c1_i32 : i32
    %4 = arith.addi %3, %arg1 : i32
    %c1024_i32 = arith.constant 1024 : i32
    %5 = arith.muli %4, %c1024_i32 : i32
    %c1024_i32_1 = arith.constant 1024 : i32
    %6 = arith.addi %5, %c1024_i32_1 : i32
    %c1024_i32_2 = arith.constant 1024 : i32
    %7 = arith.cmpi sle, %6, %c1024_i32_2 : i32
    %8 = arith.extui %7 : i1 to i32
    %c0_i32_3 = arith.constant 0 : i32
    %9 = arith.cmpi ne, %8, %c0_i32_3 : i32
    scf.if %9 {
      %c0 = arith.constant 0 : index
      %c0_5 = arith.constant 0 : index
      %13 = vector.load %arg3[%c0, %c0_5] : memref<8x128xf32, #tpu.memory_space<vmem>>, vector<8x128xf32>
      %c0_6 = arith.constant 0 : index
      %c0_7 = arith.constant 0 : index
      %14 = vector.load %arg4[%c0_6, %c0_7] : memref<8x128xf32, #tpu.memory_space<vmem>>, vector<8x128xf32>
      %c0_i32_8 = arith.constant 0 : i32
      %c8_i32 = arith.constant 8 : i32
      %15 = arith.muli %c0_i32_8, %c8_i32 : i32
      %16 = tpu.assume_multiple %15, 8 : i32
      %17 = arith.index_cast %16 : i32 to index
      %c0_9 = arith.constant 0 : index
      %18 = vector.load %arg2[%17, %c0_9] : memref<8x128xf32, #tpu.memory_space<vmem>>, vector<8x128xf32>
      %19 = arith.addf %13, %18 : vector<8x128xf32>
      %20 = arith.mulf %18, %18 : vector<8x128xf32>
      %21 = arith.addf %14, %20 : vector<8x128xf32>
      %c1_i32_10 = arith.constant 1 : i32
      %c0_11 = arith.constant 0 : index
      %c0_12 = arith.constant 0 : index
      %22 = vector.load %arg3[%c0_11, %c0_12] : memref<8x128xf32, #tpu.memory_space<vmem>>, vector<8x128xf32>
      tpu.vector_store %arg3[%c0_11, %c0_12], %19 {strides = array<i32>} : memref<8x128xf32, #tpu.memory_space<vmem>>, vector<8x128xf32>,
      %c0_13 = arith.constant 0 : index
      %c0_14 = arith.constant 0 : index
      %23 = vector.load %arg4[%c0_13, %c0_14] : memref<8x128xf32, #tpu.memory_space<vmem>>, vector<8x128xf32>
      tpu.vector_store %arg4[%c0_13, %c0_14], %21 {strides = array<i32>} : memref<8x128xf32, #tpu.memory_space<vmem>>, vector<8x128xf32>,
    } else {
    }
    %true = arith.constant true
    %10 = arith.xori %7, %true : i1
    %11 = arith.extui %10 : i1 to i32
    %c0_i32_4 = arith.constant 0 : i32
    %12 = arith.cmpi ne, %11, %c0_i32_4 : i32
    scf.if %12 {
      %13 = tpu.iota {dimensions = array<i32: 0>} : vector<8x128xi32>
      %c128_i32 = arith.constant 128 : i32
      %14 = vector.broadcast %c128_i32 : i32 to vector<8x128xi32>
      %15 = arith.muli %13, %14 : vector<8x128xi32>
      %16 = tpu.iota {dimensions = array<i32: 1>} : vector<8x128xi32>
      %17 = arith.addi %15, %16 : vector<8x128xi32>
      %c0 = arith.constant 0 : index
      %c0_5 = arith.constant 0 : index
      %18 = vector.load %arg3[%c0, %c0_5] : memref<8x128xf32, #tpu.memory_space<vmem>>, vector<8x128xf32>
      %c0_6 = arith.constant 0 : index
      %c0_7 = arith.constant 0 : index
      %19 = vector.load %arg4[%c0_6, %c0_7] : memref<8x128xf32, #tpu.memory_space<vmem>>, vector<8x128xf32>
      %c0_i32_8 = arith.constant 0 : i32
      %c8_i32 = arith.constant 8 : i32
      %20 = arith.muli %c0_i32_8, %c8_i32 : i32
      %21 = tpu.assume_multiple %20, 8 : i32
      %22 = arith.index_cast %21 : i32 to index
      %c0_9 = arith.constant 0 : index
      %23 = vector.load %arg2[%22, %c0_9] : memref<8x128xf32, #tpu.memory_space<vmem>>, vector<8x128xf32>
      %c1024_i32_10 = arith.constant 1024 : i32
      %24 = arith.muli %c0_i32_8, %c1024_i32_10 : i32
      %25 = arith.addi %5, %24 : i32
      %26 = vector.broadcast %25 : i32 to vector<8x128xi32>
      %27 = arith.addi %26, %17 : vector<8x128xi32>
      %c1024_i32_11 = arith.constant 1024 : i32
      %28 = vector.broadcast %c1024_i32_11 : i32 to vector<8x128xi32>
      %29 = arith.cmpi slt, %27, %28 : vector<8x128xi32>
      %cst = arith.constant 0.000000e+00 : f32
      %30 = vector.broadcast %cst : f32 to vector<8x128xf32>
      %31 = arith.select %29, %23, %30 : vector<8x128xi1>, vector<8x128xf32>
      %32 = arith.addf %18, %31 : vector<8x128xf32>
      %33 = arith.mulf %31, %31 : vector<8x128xf32>
      %34 = arith.addf %19, %33 : vector<8x128xf32>
      %c1_i32_12 = arith.constant 1 : i32
      %c0_13 = arith.constant 0 : index
      %c0_14 = arith.constant 0 : index
      %35 = vector.load %arg3[%c0_13, %c0_14] : memref<8x128xf32, #tpu.memory_space<vmem>>, vector<8x128xf32>
      tpu.vector_store %arg3[%c0_13, %c0_14], %32 {strides = array<i32>} : memref<8x128xf32, #tpu.memory_space<vmem>>, vector<8x128xf32>,
      %c0_15 = arith.constant 0 : index
      %c0_16 = arith.constant 0 : index
      %36 = vector.load %arg4[%c0_15, %c0_16] : memref<8x128xf32, #tpu.memory_space<vmem>>, vector<8x128xf32>
      tpu.vector_store %arg4[%c0_15, %c0_16], %34 {strides = array<i32>} : memref<8x128xf32, #tpu.memory_space<vmem>>, vector<8x128xf32>,
    } else {
    }
    return
  }
  func.func @transform_0(%arg0: i32, %arg1: i32) -> (i32, i32) {
    %c1_i32 = arith.constant 1 : i32
    %0 = arith.muli %arg0, %c1_i32 : i32
    %1 = arith.addi %0, %arg1 : i32
    %c0_i32 = arith.constant 0 : i32
    %c0_i32_0 = arith.constant 0 : i32
    return %1, %c0_i32 : i32, i32
  }
  func.func @transform_1(%arg0: i32, %arg1: i32) -> (i32, i32) {
    %c0_i32 = arith.constant 0 : i32
    %c0_i32_0 = arith.constant 0 : i32
    return %arg0, %c0_i32 : i32, i32
  }
  func.func @transform_2(%arg0: i32, %arg1: i32) -> (i32, i32) {
    %c0_i32 = arith.constant 0 : i32
    %c0_i32_0 = arith.constant 0 : i32
    return %arg0, %c0_i32 : i32, i32
  }
}

</mosaic_0001>

<llo_original>
// kernel: tpu_custom_call.1
$region0: #{tpu_custom_call.1}
  #allocation0 [shape = 'u32[]', space=smem, size = 0x4, offset = 0x4, fixed_abs, tag = 'smem constant byte address 0x4 - core index']
  #allocation1 [shape = 'u32[72,128]{1,0:T(1,128)}', space=vmem, size = 0x9000, scoped, tag = 'internal scratch']
  %s0 = inlined_call_operand.hbm [shape: f32[8,128], index: 0, kind: input, shape index: {}]
  %s1 = inlined_call_operand.hbm [shape: f32[8,128], index: 1, kind: output, shape index: {0}]
  %s2 = inlined_call_operand.hbm [shape: f32[8,128], index: 2, kind: output, shape index: {1}]
  %3 = xla_tuple %s1, %s2
  %s4 = sld [smem:[#allocation0]]
  $region38: #{tpu_custom_call.1} parent=0
    _
  %s6 = ssub.s32 1, %s4
  %s7 = scalar_select 0, %s6, %s4
  $region1: #{tpu_custom_call.1} parent=0
    #allocation2 [shape = 'u8[4096]{0}', space=vmem, size = 0x1000, scoped, tag = 'input window, operand 0, single buffered']
    #allocation3 [shape = 's32[1]{0}', space=sflag, size = 0x4, scoped, tag = 'scoped memory for tpu_custom_call.1']
    #allocation4 [shape = 's32[1]{0}', space=sflag, size = 0x4, scoped, tag = 'scoped memory for tpu_custom_call.1']
    #allocation5 [shape = 'u8[4096]{0}', space=vmem, size = 0x1000, scoped, tag = 'output window, operand 0, single buffered']
    #allocation6 [shape = 'u8[4096]{0}', space=vmem, size = 0x1000, scoped, tag = 'output window, operand 1, single buffered']
    #allocation7 [shape = 's32[1]{0}', space=sflag, size = 0x4, scoped, tag = 'scoped memory for tpu_custom_call.1']
    %8 = vsyncpa [#allocation3], 0
    %9 = vsyncpa [#allocation4], 0
    %10 = vsyncpa [#allocation7], 0
    // Predicated region
    $region2: #{tpu_custom_call.1} parent=1 // pred_check
      _
    $region3: #{tpu_custom_call.1} parent=1 // pred_check_branch
      %12 = sbr.rel (0) target = $region5
    $region4: #{tpu_custom_call.1} parent=1 // pred_region
      %s13 = sadd.s32 0, 0
      %15 = vsyncadd [#allocation3], 0
      %s16 = smul.addr %s13, 8
      %s17 = scalar_lea.hbm %s0, %s16
      %s19 = sshll.u32 %s17, 4
      %s20 = int_to_ptr.hbm [resolvable:$true] %s19
      %s21 = sshll.u32 [#allocation2], 4
      %s22 = int_to_ptr.vmem [resolvable:$true] %s21
      %24 = dma.hbm_to_vmem [thread:$0]  %s20, 128, %s22, [#allocation3]
    $region5: #{tpu_custom_call.1} parent=1 // pred_fallthru
      _
    // Predicated region
    $region6: #{tpu_custom_call.1} parent=1 // pred_check
      _
    $region7: #{tpu_custom_call.1} parent=1 // pred_check_branch
      %26 = sbr.rel (0) target = $region9
    $region8: #{tpu_custom_call.1} parent=1 // pred_region
      %28 = dma.done [#allocation3], 128
    $region9: #{tpu_custom_call.1} parent=1 // pred_fallthru
      _
    %s29 = sadd.s32 0, 0
    %p30 = scmp.eq.s32.totalorder 0, 0
    // Predicated region
    $region10: #{tpu_custom_call.1} parent=1 // pred_check
      %p31 = pneg %p30
    $region11: #{tpu_custom_call.1} parent=1 // pred_check_branch
      %33 = sbr.rel (%p31) target = $region13
    $region12: #{tpu_custom_call.1} parent=1 // pred_region
      %34 = vst [vmem:[#allocation5] sm:$0xff] 0.0
      %35 = vst [vmem:[#allocation6] sm:$0xff] 0.0
    $region13: #{tpu_custom_call.1} parent=1 // pred_fallthru
      _
    %s36 = sadd.s32 0, 0
    %s37 = smul.u32 %s36, 1024
    %s38 = sadd.s32 %s37, 1024
    %p39 = scmp.le.s32.totalorder %s38, 1024
    // Predicated region
    $region14: #{tpu_custom_call.1} parent=1 // pred_check
      %p40 = pneg %p39
    $region15: #{tpu_custom_call.1} parent=1 // pred_check_branch
      %42 = sbr.rel (%p40) target = $region17
    $region16: #{tpu_custom_call.1} parent=1 // pred_region
      %v43 = vld [vmem:[#allocation5] sm:$0xff]
      %v44 = vld [vmem:[#allocation6] sm:$0xff]
      %v45 = vld [vmem:[#allocation2] sm:$0xff]
      %v46 = vadd.f32 %v43, %v45
      %v47 = vmul.f32 %v45, %v45
      %v48 = vadd.f32 %v44, %v47
      %49 = vst [vmem:[#allocation5] sm:$0xff] %v46
      %50 = vst [vmem:[#allocation6] sm:$0xff] %v48
    $region17: #{tpu_custom_call.1} parent=1 // pred_fallthru
      _
    %p51 = scmp.gt.s32.totalorder %s38, 1024
    // Predicated region
    $region18: #{tpu_custom_call.1} parent=1 // pred_check
      %p52 = pneg %p51
    $region19: #{tpu_custom_call.1} parent=1 // pred_check_branch
      %54 = sbr.rel (%p52) target = $region21
    $region20: #{tpu_custom_call.1} parent=1 // pred_region
      %v55 = vlaneseq
      %v56 = vshrl.u32 %v55, 7
      %v57 = vmul.u32 %v56, 128
      %v58 = vlaneseq
      %v59 = vand.u32 %v58, 127
      %v60 = vadd.s32 %v57, %v59
      %v61 = vld [vmem:[#allocation5] sm:$0xff]
      %v62 = vld [vmem:[#allocation6] sm:$0xff]
      %v63 = vld [vmem:[#allocation2] sm:$0xff]
      %v64 = vstv %s37
      %v65 = vadd.s32 %v64, %v60
      %vm66 = vcmp.lt.s32.totalorder %v65, 1024
      %v67 = vsel %vm66, %v63, 0.0
      %v68 = vadd.f32 %v61, %v67
      %v69 = vmul.f32 %v67, %v67
      %v70 = vadd.f32 %v62, %v69
      %71 = vst [vmem:[#allocation5] sm:$0xff] %v68
      %72 = vst [vmem:[#allocation6] sm:$0xff] %v70
    $region21: #{tpu_custom_call.1} parent=1 // pred_fallthru
      _
    // Predicated region
    $region22: #{tpu_custom_call.1} parent=1 // pred_check
      _
    $region23: #{tpu_custom_call.1} parent=1 // pred_check_branch
      %74 = sbr.rel (0) target = $region25
    $region24: #{tpu_custom_call.1} parent=1 // pred_region
      %76 = vsyncadd [#allocation4], 0
      %s78 = sshll.u32 [#allocation5], 4
      %s79 = int_to_ptr.vmem [resolvable:$true] %s78
      %s80 = sshll.u32 %s1, 4
      %s81 = int_to_ptr.hbm [resolvable:$true] %s80
      %83 = dma.vmem_to_hbm [thread:$0]  %s79, 128, %s81, [#allocation4]
    $region25: #{tpu_custom_call.1} parent=1 // pred_fallthru
      _
    // Predicated region
    $region26: #{tpu_custom_call.1} parent=1 // pred_check
      _
    $region27: #{tpu_custom_call.1} parent=1 // pred_check_branch
      %85 = sbr.rel (0) target = $region29
    $region28: #{tpu_custom_call.1} parent=1 // pred_region
      %87 = vsyncadd [#allocation7], 0
      %s89 = sshll.u32 [#allocation6], 4
      %s90 = int_to_ptr.vmem [resolvable:$true] %s89
      %s91 = sshll.u32 %s2, 4
      %s92 = int_to_ptr.hbm [resolvable:$true] %s91
      %94 = dma.vmem_to_hbm [thread:$0]  %s90, 128, %s92, [#allocation7]
    $region29: #{tpu_custom_call.1} parent=1 // pred_fallthru
      _
    // Predicated region
    $region30: #{tpu_custom_call.1} parent=1 // pred_check
      _
    $region31: #{tpu_custom_call.1} parent=1 // pred_check_branch
      %96 = sbr.rel (0) target = $region33
    $region32: #{tpu_custom_call.1} parent=1 // pred_region
      %98 = dma.done [#allocation4], 128
    $region33: #{tpu_custom_call.1} parent=1 // pred_fallthru
      _
    // Predicated region
    $region34: #{tpu_custom_call.1} parent=1 // pred_check
      _
    $region35: #{tpu_custom_call.1} parent=1 // pred_check_branch
      %100 = sbr.rel (0) target = $region37
    $region36: #{tpu_custom_call.1} parent=1 // pred_region
      %102 = dma.done [#allocation7], 128
    $region37: #{tpu_custom_call.1} parent=1 // pred_fallthru
      _
    %103 = vsyncpa [#allocation3], 1
    %104 = vsyncpa [#allocation4], 1
    %105 = vsyncpa [#allocation7], 1

</llo_original>
